<compile_context>
chip_gen: v5e
topology: v5e:2x2
jax: 0.10.0
libtpu: 0.0.40
codegen_flags: <defaults>
</compile_context>

<pallas_src>
import jax
import jax.numpy as jnp
from jax.experimental import pallas as pl
from jax.experimental.pallas import tpu as pltpu


# ----------------------------------------------------------------------------
# Activation (matches the `activation(x, activation_str)` helper).
# ----------------------------------------------------------------------------
def _apply_activation(y, activation_str):
    if activation_str in ("ReLu", "relu"):
        return jnp.maximum(y, 0.0)
    elif activation_str in ("LeakyReLU", "leaky_relu"):
        return jnp.where(y > 0, y, 0.01 * y)  # torch LeakyReLU default slope
    elif activation_str in ("Tanh", "tanh"):
        return jnp.tanh(y)
    elif activation_str in ("GELU", "gelu"):
        return jax.nn.gelu(y)
    elif activation_str in ("sigmoid", "Sigmoid"):
        return jax.nn.sigmoid(y)
    elif activation_str in ("Sin", "sin"):
        return jnp.sin(y)
    else:
        raise ValueError(f"unknown activation {activation_str}")


_TRANSCENDENTAL_ACTS = ("Tanh", "tanh", "GELU", "gelu", "sigmoid", "Sigmoid",
                        "Sin", "sin")


def _round_up(n, m):
    return ((n + m - 1) // m) * m


# ----------------------------------------------------------------------------
# Fused MLP kernel factory.
#   refs layout: x_ref, w_0..w_{L-1}, b_0..b_{L-1}, o_ref
#   Weights/biases are VMEM-resident across the whole batch grid; activations
#   are carried in vregs/VMEM between layers (never written to HBM).
# ----------------------------------------------------------------------------
def _make_fnn_kernel(n_layers, activation_str, scale, compute_dtype):
    f32_path = jnp.dtype(compute_dtype) == jnp.float32
    mm_precision = jax.lax.Precision.HIGHEST if f32_path else None

    def kernel(*refs):
        x_ref = refs[0]
        w_refs = refs[1:1 + n_layers]
        b_refs = refs[1 + n_layers:1 + 2 * n_layers]
        o_ref = refs[1 + 2 * n_layers]

        h = x_ref[...]
        for i in range(n_layers):
            # MXU matmul, f32 accumulation. Weights are already compute_dtype
            # (pre-cast once in prepare_params); only the activation carried
            # from the previous f32 epilogue may need a cast on the bf16 path.
            y = jnp.dot(
                h.astype(compute_dtype),
                w_refs[i][...],
                preferred_element_type=jnp.float32,
                precision=mm_precision,
            )
            y = y + b_refs[i][...]          # f32 epilogue on every generation
            if i < n_layers - 1:
                h = _apply_activation(y, activation_str)
            else:
                h = y * scale               # 1 / G_dim ** exp_G folded in
        o_ref[...] = h.astype(o_ref.dtype)

    return kernel


# ----------------------------------------------------------------------------
# One-time parameter preparation: transpose PyTorch (out, in) -> (in, out),
# reshape bias to (1, out), optionally pre-cast weights to the matmul compute
# dtype.  NO feature padding: the MXU pads small K/N internally for free, and
# keeping true widths avoids inflating the streamed x / output HBM traffic.
# ----------------------------------------------------------------------------
def prepare_params(weights, biases, compute_dtype=jnp.float32):
    ws = [jnp.asarray(w, jnp.float32).T.astype(compute_dtype) for w in weights]
    bs = [jnp.asarray(b, jnp.float32).reshape(1, -1) for b in biases]
    return ws, bs


# ----------------------------------------------------------------------------
# FNN forward: one fused pallas_call, grid over batch tiles only.
# ----------------------------------------------------------------------------
def fnn_forward(x, prep_weights, prep_biases, activation_str, G_dim, exp_G,
                *, tile_b=None, compute_dtype=jnp.float32):
    B, Din = x.shape
    n_layers = len(prep_weights)
    assert prep_weights[0].shape[0] == Din
    out_dim = prep_weights[-1].shape[1]
    scale = 1.0 / (float(G_dim) ** float(exp_G))

    # ---- batch tiling policy ------------------------------------------------
    #  * tile_b multiple of 8 (sublane), capped at 1024 (amortizes ~0.35us/step).
    #  * >= 2 (even) grid steps when B > 8 so v7x megacore shards the batch.
    #  * grid = cdiv(B, tile_b): Pallas masks OOB writes on the partial last
    #    tile, so pad waste is < 1 tile and no wrapper-side padding copy exists.
    if tile_b is None:
        cap = 1024
        n_tiles = max(1, pl.cdiv(B, cap))
        if B > 8:
            n_tiles = max(2, n_tiles)
        if n_tiles > 1 and n_tiles % 2:
            n_tiles += 1
        tile_b = min(cap, max(8, _round_up(pl.cdiv(B, n_tiles), 8)))
    grid = (pl.cdiv(B, tile_b),)

    # Optional bf16 matmul path (v6e/v7x): halve the dominant x HBM stream too.
    x_in = x if x.dtype == jnp.dtype(compute_dtype) else x.astype(compute_dtype)

    # ---- specs --------------------------------------------------------------
    in_specs = [pl.BlockSpec((tile_b, Din), lambda i: (i, 0))]
    for w in prep_weights:                       # VMEM-resident across grid
        in_specs.append(pl.BlockSpec(w.shape, lambda i: (0, 0)))
    for b in prep_biases:                        # VMEM-resident across grid
        in_specs.append(pl.BlockSpec(b.shape, lambda i: (0, 0)))
    # Narrow (true-width) output block: 16x fewer HBM bytes than a 128-padded
    # store for out_dim=8; wins in the HBM-writeback-bound regime.
    out_specs = pl.BlockSpec((tile_b, out_dim), lambda i: (i, 0))

    # ---- true-cost estimate (padding-free numbers) --------------------------
    flops = 2 * B * sum(w.shape[0] * w.shape[1] for w in prep_weights)
    transcendentals = (B * sum(w.shape[1] for w in prep_weights[:-1])
                       if activation_str in _TRANSCENDENTAL_ACTS else 0)
    bytes_accessed = (x_in.size * x_in.dtype.itemsize
                      + B * out_dim * 4
                      + sum(w.size * w.dtype.itemsize for w in prep_weights)
                      + sum(b.size * b.dtype.itemsize for b in prep_biases))
    cost = pl.CostEstimate(flops=int(flops),
                           transcendentals=int(transcendentals),
                           bytes_accessed=int(bytes_accessed))

    kernel = _make_fnn_kernel(n_layers, activation_str, scale, compute_dtype)

    return pl.pallas_call(
        kernel,
        out_shape=jax.ShapeDtypeStruct((B, out_dim), jnp.float32),
        grid=grid,
        in_specs=in_specs,
        out_specs=out_specs,
        compiler_params=pltpu.CompilerParams(
            dimension_semantics=("parallel",),
        ),
        cost_estimate=cost,
    )(x_in, *prep_weights, *prep_biases)


# ----------------------------------------------------------------------------
# Deterministic parameter init (synthetic; mimics nn.Linear uniform fan-in init)
# ----------------------------------------------------------------------------
def init_params(layers, seed=0):
    key = jax.random.PRNGKey(seed)
    weights, biases = [], []
    for i in range(len(layers) - 1):
        fan_in, fan_out = layers[i], layers[i + 1]
        key, kw, kb = jax.random.split(key, 3)
        bound = 1.0 / jnp.sqrt(fan_in)
        weights.append(
            jax.random.uniform(kw, (fan_out, fan_in), jnp.float32, -bound, bound))
        biases.append(
            jax.random.uniform(kb, (fan_out,), jnp.float32, -bound, bound))
    return weights, biases


if __name__ == "__main__":
    # Small config consistent with the module.
    layers = [16, 32, 32, 8]      # self.layers
    activation_str = "tanh"       # self.activation_str
    G_dim = 4                     # config['G_dim']
    exp_G = 0.5                   # config['exp_G']
    batch = 20                    # exercises a 2-step grid + partial last tile

    weights, biases = init_params(layers, seed=0)
    # Done once at parameter-prep time, not per forward call.
    prep_w, prep_b = prepare_params(weights, biases, compute_dtype=jnp.float32)

    key = jax.random.PRNGKey(0)
    x = jax.random.normal(key, (batch, layers[0]), dtype=jnp.float32)

    out = fnn_forward(
        x, prep_w, prep_b, activation_str, G_dim, exp_G,
        compute_dtype=jnp.float32,  # set jnp.bfloat16 on v6e/v7x if tolerance allows
    )
    out = jax.block_until_ready(out)

    # Pure-JAX reference of the same semantics (unprepared params, true-f32 mm).
    hi = jax.lax.Precision.HIGHEST
    ref = x
    for i, (w, b) in enumerate(zip(weights, biases)):
        ref = jnp.dot(ref, w.T, precision=hi) + b
        if i != len(weights) - 1:
            ref = _apply_activation(ref, activation_str)
    ref = ref / (G_dim ** exp_G)

    assert out.shape == ref.shape, (out.shape, ref.shape)
    assert jnp.allclose(out, ref, atol=1e-5, rtol=1e-5), "mismatch vs reference"

    print("KERNEL_OK")
</pallas_src>

<mosaic_0001>
module attributes {stable_mosaic.version = 11 : i64} {
  func.func @kernel(%arg0: i32, %arg1: memref<16x16xf32, #tpu.memory_space<vmem>>, %arg2: memref<16x32xf32, #tpu.memory_space<vmem>>, %arg3: memref<32x32xf32, #tpu.memory_space<vmem>>, %arg4: memref<32x8xf32, #tpu.memory_space<vmem>>, %arg5: memref<1x32xf32, #tpu.memory_space<vmem>>, %arg6: memref<1x32xf32, #tpu.memory_space<vmem>>, %arg7: memref<1x8xf32, #tpu.memory_space<vmem>>, %arg8: memref<16x8xf32, #tpu.memory_space<vmem>>) attributes {dimension_semantics = [#tpu.dimension_semantics<parallel>], iteration_bounds = array<i64: 2>, scalar_prefetch = 0 : i64, scratch_operands = 0 : i64, tpu.core_type = #tpu.core_type<tc>, window_params = [{transform_indices = @transform_0, window_bounds = array<i64: 16, 16>}, {pipeline_mode = #tpu.pipeline_mode<synchronous>, transform_indices = @transform_1, window_bounds = array<i64: 16, 32>}, {pipeline_mode = #tpu.pipeline_mode<synchronous>, transform_indices = @transform_2, window_bounds = array<i64: 32, 32>}, {pipeline_mode = #tpu.pipeline_mode<synchronous>, transform_indices = @transform_3, window_bounds = array<i64: 32, 8>}, {pipeline_mode = #tpu.pipeline_mode<synchronous>, transform_indices = @transform_4, window_bounds = array<i64: 1, 32>}, {pipeline_mode = #tpu.pipeline_mode<synchronous>, transform_indices = @transform_5, window_bounds = array<i64: 1, 32>}, {pipeline_mode = #tpu.pipeline_mode<synchronous>, transform_indices = @transform_6, window_bounds = array<i64: 1, 8>}, {transform_indices = @transform_7, window_bounds = array<i64: 16, 8>}]} {
    %c0 = arith.constant 0 : index
    %c0_0 = arith.constant 0 : index
    %0 = vector.load %arg1[%c0, %c0_0] : memref<16x16xf32, #tpu.memory_space<vmem>>, vector<16x16xf32>
    %c0_1 = arith.constant 0 : index
    %c0_2 = arith.constant 0 : index
    %1 = vector.load %arg2[%c0_1, %c0_2] : memref<16x32xf32, #tpu.memory_space<vmem>>, vector<16x32xf32>
    %cst = arith.constant dense<0.000000e+00> : vector<16x32xf32>
    %2 = tpu.matmul %0, %1, %cst {dimension_numbers = #tpu.dot_dimension_numbers<[1], [0], [0], [1], [0, 0, 1, 1], [], []>, precision = #tpu.contract_precision<fp32>} : vector<16x16xf32>, vector<16x32xf32>, vector<16x32xf32> -> vector<16x32xf32>
    %c0_3 = arith.constant 0 : index
    %c0_4 = arith.constant 0 : index
    %3 = vector.load %arg5[%c0_3, %c0_4] : memref<1x32xf32, #tpu.memory_space<vmem>>, vector<1x32xf32>
    %4 = vector.broadcast %3 : vector<1x32xf32> to vector<16x32xf32>
    %5 = arith.addf %2, %4 : vector<16x32xf32>
    %6 = math.tanh %5 : vector<16x32xf32>
    %c0_5 = arith.constant 0 : index
    %c0_6 = arith.constant 0 : index
    %7 = vector.load %arg3[%c0_5, %c0_6] : memref<32x32xf32, #tpu.memory_space<vmem>>, vector<32x32xf32>
    %cst_7 = arith.constant dense<0.000000e+00> : vector<16x32xf32>
    %8 = tpu.matmul %6, %7, %cst_7 {dimension_numbers = #tpu.dot_dimension_numbers<[1], [0], [0], [1], [0, 0, 1, 1], [], []>, precision = #tpu.contract_precision<fp32>} : vector<16x32xf32>, vector<32x32xf32>, vector<16x32xf32> -> vector<16x32xf32>
    %c0_8 = arith.constant 0 : index
    %c0_9 = arith.constant 0 : index
    %9 = vector.load %arg6[%c0_8, %c0_9] : memref<1x32xf32, #tpu.memory_space<vmem>>, vector<1x32xf32>
    %10 = vector.broadcast %9 : vector<1x32xf32> to vector<16x32xf32>
    %11 = arith.addf %8, %10 : vector<16x32xf32>
    %12 = math.tanh %11 : vector<16x32xf32>
    %c0_10 = arith.constant 0 : index
    %c0_11 = arith.constant 0 : index
    %13 = vector.load %arg4[%c0_10, %c0_11] : memref<32x8xf32, #tpu.memory_space<vmem>>, vector<32x8xf32>
    %cst_12 = arith.constant dense<0.000000e+00> : vector<16x8xf32>
    %14 = tpu.matmul %12, %13, %cst_12 {dimension_numbers = #tpu.dot_dimension_numbers<[1], [0], [0], [1], [0, 0, 1, 1], [], []>, precision = #tpu.contract_precision<fp32>} : vector<16x32xf32>, vector<32x8xf32>, vector<16x8xf32> -> vector<16x8xf32>
    %c0_13 = arith.constant 0 : index
    %c0_14 = arith.constant 0 : index
    %15 = vector.load %arg7[%c0_13, %c0_14] : memref<1x8xf32, #tpu.memory_space<vmem>>, vector<1x8xf32>
    %16 = vector.broadcast %15 : vector<1x8xf32> to vector<16x8xf32>
    %17 = arith.addf %14, %16 : vector<16x8xf32>
    %cst_15 = arith.constant 5.000000e-01 : f32
    %18 = vector.broadcast %cst_15 : f32 to vector<16x8xf32>
    %19 = arith.mulf %17, %18 : vector<16x8xf32>
    %c0_16 = arith.constant 0 : index
    %c0_17 = arith.constant 0 : index
    %20 = vector.load %arg8[%c0_16, %c0_17] : memref<16x8xf32, #tpu.memory_space<vmem>>, vector<16x8xf32>
    tpu.vector_store %arg8[%c0_16, %c0_17], %19 {strides = array<i32>} : memref<16x8xf32, #tpu.memory_space<vmem>>, vector<16x8xf32>,
    return
  }
  func.func @transform_0(%arg0: i32) -> (i32, i32) {
    %c0_i32 = arith.constant 0 : i32
    %c0_i32_0 = arith.constant 0 : i32
    return %arg0, %c0_i32 : i32, i32
  }
  func.func @transform_1(%arg0: i32) -> (i32, i32) {
    %c0_i32 = arith.constant 0 : i32
    %c0_i32_0 = arith.constant 0 : i32
    %c0_i32_1 = arith.constant 0 : i32
    return %c0_i32, %c0_i32_0 : i32, i32
  }
  func.func @transform_2(%arg0: i32) -> (i32, i32) {
    %c0_i32 = arith.constant 0 : i32
    %c0_i32_0 = arith.constant 0 : i32
    %c0_i32_1 = arith.constant 0 : i32
    return %c0_i32, %c0_i32_0 : i32, i32
  }
  func.func @transform_3(%arg0: i32) -> (i32, i32) {
    %c0_i32 = arith.constant 0 : i32
    %c0_i32_0 = arith.constant 0 : i32
    %c0_i32_1 = arith.constant 0 : i32
    return %c0_i32, %c0_i32_0 : i32, i32
  }
  func.func @transform_4(%arg0: i32) -> (i32, i32) {
    %c0_i32 = arith.constant 0 : i32
    %c0_i32_0 = arith.constant 0 : i32
    %c0_i32_1 = arith.constant 0 : i32
    return %c0_i32, %c0_i32_0 : i32, i32
  }
  func.func @transform_5(%arg0: i32) -> (i32, i32) {
    %c0_i32 = arith.constant 0 : i32
    %c0_i32_0 = arith.constant 0 : i32
    %c0_i32_1 = arith.constant 0 : i32
    return %c0_i32, %c0_i32_0 : i32, i32
  }
  func.func @transform_6(%arg0: i32) -> (i32, i32) {
    %c0_i32 = arith.constant 0 : i32
    %c0_i32_0 = arith.constant 0 : i32
    %c0_i32_1 = arith.constant 0 : i32
    return %c0_i32, %c0_i32_0 : i32, i32
  }
  func.func @transform_7(%arg0: i32) -> (i32, i32) {
    %c0_i32 = arith.constant 0 : i32
    %c0_i32_0 = arith.constant 0 : i32
    return %arg0, %c0_i32 : i32, i32
  }
}

</mosaic_0001>

<llo_original>
// kernel: tpu_custom_call.1
$region0: #{tpu_custom_call.1}
  #allocation0 [shape = 'u32[]', space=smem, size = 0x4, offset = 0x4, fixed_abs, tag = 'smem constant byte address 0x4 - core index']
  #allocation1 [shape = 'u32[72,128]{1,0:T(1,128)}', space=vmem, size = 0x9000, scoped, tag = 'internal scratch']
  %s0 = inlined_call_operand.vmem [shape: f32[20,16], index: 0, kind: input, shape index: {}]
  %s1 = inlined_call_operand.vmem [shape: f32[16,32], index: 1, kind: input, shape index: {}]
  %s2 = inlined_call_operand.vmem [shape: f32[32,32], index: 2, kind: input, shape index: {}]
  %s3 = inlined_call_operand.vmem [shape: f32[32,8], index: 3, kind: input, shape index: {}]
  %s4 = inlined_call_operand.vmem [shape: f32[1,32], index: 4, kind: input, shape index: {}]
  %s5 = inlined_call_operand.vmem [shape: f32[1,32], index: 5, kind: input, shape index: {}]
  %s6 = inlined_call_operand.vmem [shape: f32[1,8], index: 6, kind: input, shape index: {}]
  %s7 = inlined_call_operand.vmem [shape: f32[20,8], index: 7, kind: output, shape index: {}]
  %s8 = sld [smem:[#allocation0]]
  $region109: #{tpu_custom_call.1} parent=0
    _
  %s10 = ssub.s32 1, %s8
  %s11 = scalar_select 0, %s10, %s8
  $region1: #{tpu_custom_call.1} parent=0
    #allocation2 [shape = 'u8[16384]{0}', space=vmem, size = 0x4000, scoped, tag = 'output window, operand 0']
    loop: start=0, step=1, limit=4
    $region2: #{tpu_custom_call.1} parent=1 // loop_pre_header
      _
    $region3: #{tpu_custom_call.1} parent=1 // loop_header
      %s13 = sphi 0, %s17
      %p14 = scmp.ge.s32.totalorder %s13, 4
      %s23 = sphi 0, %s25
      %s26 = sphi 0, %s23
      %s27 = sphi 0, %s26
      %s43 = sphi 0, %s27
      %s47 = sphi 0, %s47
      %s49 = sphi 0, %s47
      %s50 = sphi 0, %s49
      %s64 = sphi 0, %s50
      %s68 = sphi 0, %s68
      %s70 = sphi 0, %s68
      %s71 = sphi 0, %s70
      %s85 = sphi 0, %s71
      %s89 = sphi 0, %s89
      %s91 = sphi 0, %s89
      %s92 = sphi 0, %s91
      %s106 = sphi 0, %s92
      %s110 = sphi 0, %s110
      %s112 = sphi 0, %s110
      %s113 = sphi 0, %s112
      %s127 = sphi 0, %s113
      %s131 = sphi 0, %s131
      %s133 = sphi 0, %s131
      %s134 = sphi 0, %s133
      %s148 = sphi 0, %s134
      %s152 = sphi 0, %s152
      %s154 = sphi 0, %s152
      %s155 = sphi 0, %s154
      %s169 = sphi 0, %s155
      %s175 = sphi 0, %s177
      %s178 = sphi 0, %s175
      %s179 = sphi 0, %s178
      %s195 = sphi 0, %s179
    $region4: #{tpu_custom_call.1} parent=1 // loop_header_branch
      %16 = sbr.rel (%p14) target = $region8
    $region5: #{tpu_custom_call.1} parent=1 // loop_body
      %s18 = ssub.s32 %s13, 1
      %s19 = ssub.s32 %s13, 2
      %s20 = sadd.s32 %s13, 1
      %s21 = ssub.s32 %s13, %s20
      %p22 = scmp.eq.s32.totalorder %s21, 0
      %s24 = sadd.s32 %s23, 1
      %s25 = scalar_select %p22, %s23, %s24
      %p28 = pneg %p22
      %p29 = scmp.eq.s32.totalorder %s13, 1
      %p30 = por %p28, %p29
      %p31 = scmp.ne.s32.totalorder %s23, %s26
      %p32 = scmp.eq.s32.totalorder %s13, 0
      %p33 = por %p31, %p32
      %p34 = scmp.ne.s32.totalorder %s23, %s26
      %p35 = scmp.eq.s32.totalorder %s18, 1
      %p36 = por %p34, %p35
      %p37 = scmp.ne.s32.totalorder %s26, %s27
      %p38 = scmp.eq.s32.totalorder %s18, 0
      %p39 = por %p37, %p38
      %p40 = scmp.ne.s32.totalorder %s26, %s27
      %p41 = scmp.eq.s32.totalorder %s19, 1
      %p42 = por %p40, %p41
      %p44 = scmp.ne.s32.totalorder %s27, %s43
      %p45 = scmp.eq.s32.totalorder %s19, 0
      %p46 = por %p44, %p45
      %s48 = sadd.s32 %s47, 1
      %p51 = scmp.eq.s32.totalorder %s13, 1
      %p52 = scmp.ne.s32.totalorder %s47, %s49
      %p53 = scmp.eq.s32.totalorder %s13, 0
      %p54 = por %p52, %p53
      %p55 = scmp.ne.s32.totalorder %s47, %s49
      %p56 = scmp.eq.s32.totalorder %s18, 1
      %p57 = por %p55, %p56
      %p58 = scmp.ne.s32.totalorder %s49, %s50
      %p59 = scmp.eq.s32.totalorder %s18, 0
      %p60 = por %p58, %p59
      %p61 = scmp.ne.s32.totalorder %s49, %s50
      %p62 = scmp.eq.s32.totalorder %s19, 1
      %p63 = por %p61, %p62
      %p65 = scmp.ne.s32.totalorder %s50, %s64
      %p66 = scmp.eq.s32.totalorder %s19, 0
      %p67 = por %p65, %p66
      %s69 = sadd.s32 %s68, 1
      %p72 = scmp.eq.s32.totalorder %s13, 1
      %p73 = scmp.ne.s32.totalorder %s68, %s70
      %p74 = scmp.eq.s32.totalorder %s13, 0
      %p75 = por %p73, %p74
      %p76 = scmp.ne.s32.totalorder %s68, %s70
      %p77 = scmp.eq.s32.totalorder %s18, 1
      %p78 = por %p76, %p77
      %p79 = scmp.ne.s32.totalorder %s70, %s71
      %p80 = scmp.eq.s32.totalorder %s18, 0
      %p81 = por %p79, %p80
      %p82 = scmp.ne.s32.totalorder %s70, %s71
      %p83 = scmp.eq.s32.totalorder %s19, 1
      %p84 = por %p82, %p83
      %p86 = scmp.ne.s32.totalorder %s71, %s85
      %p87 = scmp.eq.s32.totalorder %s19, 0
      %p88 = por %p86, %p87
      %s90 = sadd.s32 %s89, 1
      %p93 = scmp.eq.s32.totalorder %s13, 1
      %p94 = scmp.ne.s32.totalorder %s89, %s91
      %p95 = scmp.eq.s32.totalorder %s13, 0
      %p96 = por %p94, %p95
      %p97 = scmp.ne.s32.totalorder %s89, %s91
      %p98 = scmp.eq.s32.totalorder %s18, 1
      %p99 = por %p97, %p98
      %p100 = scmp.ne.s32.totalorder %s91, %s92
      %p101 = scmp.eq.s32.totalorder %s18, 0
      %p102 = por %p100, %p101
      %p103 = scmp.ne.s32.totalorder %s91, %s92
      %p104 = scmp.eq.s32.totalorder %s19, 1
      %p105 = por %p103, %p104
      %p107 = scmp.ne.s32.totalorder %s92, %s106
      %p108 = scmp.eq.s32.totalorder %s19, 0
      %p109 = por %p107, %p108
      %s111 = sadd.s32 %s110, 1
      %p114 = scmp.eq.s32.totalorder %s13, 1
      %p115 = scmp.ne.s32.totalorder %s110, %s112
      %p116 = scmp.eq.s32.totalorder %s13, 0
      %p117 = por %p115, %p116
      %p118 = scmp.ne.s32.totalorder %s110, %s112
      %p119 = scmp.eq.s32.totalorder %s18, 1
      %p120 = por %p118, %p119
      %p121 = scmp.ne.s32.totalorder %s112, %s113
      %p122 = scmp.eq.s32.totalorder %s18, 0
      %p123 = por %p121, %p122
      %p124 = scmp.ne.s32.totalorder %s112, %s113
      %p125 = scmp.eq.s32.totalorder %s19, 1
      %p126 = por %p124, %p125
      %p128 = scmp.ne.s32.totalorder %s113, %s127
      %p129 = scmp.eq.s32.totalorder %s19, 0
      %p130 = por %p128, %p129
      %s132 = sadd.s32 %s131, 1
      %p135 = scmp.eq.s32.totalorder %s13, 1
      %p136 = scmp.ne.s32.totalorder %s131, %s133
      %p137 = scmp.eq.s32.totalorder %s13, 0
      %p138 = por %p136, %p137
      %p139 = scmp.ne.s32.totalorder %s131, %s133
      %p140 = scmp.eq.s32.totalorder %s18, 1
      %p141 = por %p139, %p140
      %p142 = scmp.ne.s32.totalorder %s133, %s134
      %p143 = scmp.eq.s32.totalorder %s18, 0
      %p144 = por %p142, %p143
      %p145 = scmp.ne.s32.totalorder %s133, %s134
      %p146 = scmp.eq.s32.totalorder %s19, 1
      %p147 = por %p145, %p146
      %p149 = scmp.ne.s32.totalorder %s134, %s148
      %p150 = scmp.eq.s32.totalorder %s19, 0
      %p151 = por %p149, %p150
      %s153 = sadd.s32 %s152, 1
      %p156 = scmp.eq.s32.totalorder %s13, 1
      %p157 = scmp.ne.s32.totalorder %s152, %s154
      %p158 = scmp.eq.s32.totalorder %s13, 0
      %p159 = por %p157, %p158
      %p160 = scmp.ne.s32.totalorder %s152, %s154
      %p161 = scmp.eq.s32.totalorder %s18, 1
      %p162 = por %p160, %p161
      %p163 = scmp.ne.s32.totalorder %s154, %s155
      %p164 = scmp.eq.s32.totalorder %s18, 0
      %p165 = por %p163, %p164
      %p166 = scmp.ne.s32.totalorder %s154, %s155
      %p167 = scmp.eq.s32.totalorder %s19, 1
      %p168 = por %p166, %p167
      %p170 = scmp.ne.s32.totalorder %s155, %s169
      %p171 = scmp.eq.s32.totalorder %s19, 0
      %p172 = por %p170, %p171
      %s173 = ssub.s32 %s13, %s20
      %p174 = scmp.eq.s32.totalorder %s173, 0
      %s176 = sadd.s32 %s175, 1
      %s177 = scalar_select %p174, %s175, %s176
      %p180 = pneg %p174
      %p181 = scmp.eq.s32.totalorder %s13, 1
      %p182 = por %p180, %p181
      %p183 = scmp.ne.s32.totalorder %s175, %s178
      %p184 = scmp.eq.s32.totalorder %s13, 0
      %p185 = por %p183, %p184
      %p186 = scmp.ne.s32.totalorder %s175, %s178
      %p187 = scmp.eq.s32.totalorder %s18, 1
      %p188 = por %p186, %p187
      %p189 = scmp.ne.s32.totalorder %s178, %s179
      %p190 = scmp.eq.s32.totalorder %s18, 0
      %p191 = por %p189, %p190
      %p192 = scmp.ne.s32.totalorder %s178, %s179
      %p193 = scmp.eq.s32.totalorder %s19, 1
      %p194 = por %p192, %p193
      %p196 = scmp.ne.s32.totalorder %s179, %s195
      %p197 = scmp.eq.s32.totalorder %s19, 0
      %p198 = por %p196, %p197
      %p199 = scmp.le.s32.totalorder 1, %s13
      %p200 = scmp.lt.s32.totalorder %s13, 3
      %p201 = pnand %p199, %p200
      %p202 = pneg %p201
      // Predicated region
      $region9: #{tpu_custom_call.1} parent=5 // pred_check
        _
      $region10: #{tpu_custom_call.1} parent=5 // pred_check_branch
        %204 = sbr.rel (%p201) target = $region12
      $region11: #{tpu_custom_call.1} parent=5 // pred_region
        %s205 = ssub.s32 %s13, 1
        // Predicated region
        $region13: #{tpu_custom_call.1} parent=11 // pred_check
          %p206 = pneg %p60
        $region14: #{tpu_custom_call.1} parent=11 // pred_check_branch
          %208 = sbr.rel (%p206) target = $region16
        $region15: #{tpu_custom_call.1} parent=11 // pred_region
          _
        $region16: #{tpu_custom_call.1} parent=11 // pred_fallthru
          _
        // Predicated region
        $region17: #{tpu_custom_call.1} parent=11 // pred_check
          %p209 = pneg %p81
        $region18: #{tpu_custom_call.1} parent=11 // pred_check_branch
          %211 = sbr.rel (%p209) target = $region20
        $region19: #{tpu_custom_call.1} parent=11 // pred_region
          _
        $region20: #{tpu_custom_call.1} parent=11 // pred_fallthru
          _
        // Predicated region
        $region21: #{tpu_custom_call.1} parent=11 // pred_check
          %p212 = pneg %p102
        $region22: #{tpu_custom_call.1} parent=11 // pred_check_branch
          %214 = sbr.rel (%p212) target = $region24
        $region23: #{tpu_custom_call.1} parent=11 // pred_region
          _
        $region24: #{tpu_custom_call.1} parent=11 // pred_fallthru
          _
        // Predicated region
        $region25: #{tpu_custom_call.1} parent=11 // pred_check
          %p215 = pneg %p123
        $region26: #{tpu_custom_call.1} parent=11 // pred_check_branch
          %217 = sbr.rel (%p215) target = $region28
        $region27: #{tpu_custom_call.1} parent=11 // pred_region
          _
        $region28: #{tpu_custom_call.1} parent=11 // pred_fallthru
          _
        // Predicated region
        $region29: #{tpu_custom_call.1} parent=11 // pred_check
          %p218 = pneg %p144
        $region30: #{tpu_custom_call.1} parent=11 // pred_check_branch
          %220 = sbr.rel (%p218) target = $region32
        $region31: #{tpu_custom_call.1} parent=11 // pred_region
          _
        $region32: #{tpu_custom_call.1} parent=11 // pred_fallthru
          _
        // Predicated region
        $region33: #{tpu_custom_call.1} parent=11 // pred_check
          %p221 = pneg %p165
        $region34: #{tpu_custom_call.1} parent=11 // pred_check_branch
          %223 = sbr.rel (%p221) target = $region36
        $region35: #{tpu_custom_call.1} parent=11 // pred_region
          _
        $region36: #{tpu_custom_call.1} parent=11 // pred_fallthru
          _
      $region12: #{tpu_custom_call.1} parent=5 // pred_fallthru
        _
      %p224 = scmp.lt.s32.totalorder %s13, 2
      // Predicated region
      $region37: #{tpu_custom_call.1} parent=5 // pred_check
        %p225 = pneg %p224
      $region38: #{tpu_custom_call.1} parent=5 // pred_check_branch
        %227 = sbr.rel (%p225) target = $region40
      $region39: #{tpu_custom_call.1} parent=5 // pred_region
        // Predicated region
        $region41: #{tpu_custom_call.1} parent=39 // pred_check
          %p228 = pneg %p33
        $region42: #{tpu_custom_call.1} parent=39 // pred_check_branch
          %230 = sbr.rel (%p228) target = $region44
        $region43: #{tpu_custom_call.1} parent=39 // pred_region
          %s231 = smul.u32 2, %s13
          %s232 = ssub.s32 3, %s231
          %p233 = scmp.lt.s32.totalorder %s232, 2
          %s234 = scalar_select %p233, %s232, 2
          %s235 = smul.u32 8, %s234
          %p236 = scmp.lt.s32.totalorder %s231, 2
          %s237 = scalar_select %p236, %s231, 2
          %s238 = smul.addr %s237, 8
          %s239 = scalar_lea.vmem %s0, %s238
          %s240 = smul.u32 2, %s13
          %s241 = ssub.s32 3, %s240
          %p242 = scmp.lt.s32.totalorder %s241, 2
          %s243 = scalar_select %p242, %s241, 2
          %s244 = smul.u32 8, %s243
        $region44: #{tpu_custom_call.1} parent=39 // pred_fallthru
          _
      $region40: #{tpu_custom_call.1} parent=5 // pred_fallthru
        _
      %p245 = scmp.le.s32.totalorder 1, %s13
      %p246 = scmp.lt.s32.totalorder %s13, 3
      %p247 = pnand %p245, %p246
      %p248 = pneg %p247
      // Predicated region
      $region45: #{tpu_custom_call.1} parent=5 // pred_check
        _
      $region46: #{tpu_custom_call.1} parent=5 // pred_check_branch
        %250 = sbr.rel (%p247) target = $region48
      $region47: #{tpu_custom_call.1} parent=5 // pred_region
        %s251 = ssub.s32 %s13, 1
        %s252 = smul.u32 2, %s18
        %s253 = ssub.s32 3, %s252
        %p254 = scmp.lt.s32.totalorder %s253, 2
        %s255 = scalar_select %p254, %s253, 2
        %s256 = smul.u32 8, %s255
        %p257 = scmp.lt.s32.totalorder %s252, 2
        %s258 = scalar_select %p257, %s252, 2
        %s259 = smul.addr %s258, 8
        %s260 = scalar_lea.vmem %s0, %s259
        %p261 = pneg %p39
        %p262 = pneg %p36
        %p263 = pneg %p60
        %p264 = pneg %p57
        %p265 = pneg %p81
        %p266 = pneg %p78
        %p267 = pneg %p102
        %p268 = pneg %p99
        %p269 = pneg %p123
        %p270 = pneg %p120
        %p271 = pneg %p144
        %p272 = pneg %p141
        %p273 = pneg %p165
        %p274 = pneg %p162
        %p275 = pneg %p191
        %p276 = pneg %p188
        %s277 = sand.u32 %s178, 1
        %s278 = sand.u32 %s178, 1
        %s279 = smul.addr %s278, 16
        %s280 = scalar_lea.vmem [#allocation2], %s279
        %s281 = smul.u32 2, %s18
        %s282 = ssub.s32 3, %s281
        %p283 = scmp.lt.s32.totalorder %s282, 2
        %s284 = scalar_select %p283, %s282, 2
        %s285 = smul.u32 8, %s284
        %p286 = scmp.lt.s32.totalorder %s281, 2
        %s287 = scalar_select %p286, %s281, 2
        %s288 = smul.addr %s287, 8
        %s289 = scalar_lea.vmem %s0, %s288
        %s290 = smul.u32 2, %s18
        %s291 = ssub.s32 3, %s290
        %p292 = scmp.lt.s32.totalorder %s291, 2
        %s293 = scalar_select %p292, %s291, 2
        %s294 = smul.u32 8, %s293
        %s295 = smul.u32 2, %s18
        %s296 = ssub.s32 3, %s295
        %p297 = scmp.lt.s32.totalorder %s296, 2
        %s298 = scalar_select %p297, %s296, 2
        %s299 = smul.u32 8, %s298
        %v300 = vld [vmem:[%s289] sm:$0xff]
        %v301 = vld [vmem:[%s289 + $0x8] sm:$0xff]
        %v302 = vld [vmem:[%s1] sm:$0xff]
        %v303 = vld [vmem:[%s1 + $0x8] sm:$0xff]
        %v304 = vld [vmem:[%s4] sm:$0x1]
        %v306 = vperm.slane %v304, 0
        %vm308 = vcmask 130048
        %v310 = vsel %vm308, %v300, 0
        %v313 = vsel %vm308, %v301, 0
        %315 = vmatpush.msra.mxu0 0.0
        %316 = vmatpush.msra.mxu0 0.0
        %317 = vmatpush.msra.mxu0 0.0
        %318 = vmatpush.msra.mxu0 0.0
        %319 = vmatpush.msra.mxu0 0.0
        %320 = vmatpush.msra.mxu0 0.0
        %321 = vmatpush.msra.mxu0 0.0
        %322 = vmatpush.msra.mxu0 0.0
        %323 = vmatpush.msra.mxu0 0.0
        %324 = vmatpush.msra.mxu0 0.0
        %325 = vmatpush.msra.mxu0 0.0
        %326 = vmatpush.msra.mxu0 0.0
        %327 = vmatpush.msra.mxu0 0.0
        %328 = vmatpush.msra.mxu0 0.0
        %v329 = vand.u32 %v303, 4294901760
        %330 = vmatpush.msra.mxu0 %v329
        %v331 = vand.u32 %v302, 4294901760
        %332 = vmatpush.msra.mxu0 %v331
        %v333 = vand.u32 %v310, 4294901760
        %v334 = vsub.f32 %v310, %v333
        %v335 = vand.u32 %v334, 4294901760
        %v336 = vsub.f32 %v334, %v335
        %v337 = vand.u32 %v336, 4294901760
        %338 = vmatmul.f32.gmra.mxu0 %v337
        %v339 = vpop.f32.mrf.mxu0
        %v340 = vadd.f32 %v306, %v339
        %v341 = vand.u32 %v313, 4294901760
        %v342 = vsub.f32 %v313, %v341
        %v343 = vand.u32 %v342, 4294901760
        %v344 = vsub.f32 %v342, %v343
        %v345 = vand.u32 %v344, 4294901760
        %346 = vmatmul.f32.gmra.mxu0 %v345
        %v347 = vpop.f32.mrf.mxu0
        %v348 = vadd.f32 %v306, %v347
        %349 = vdwg.mxu0
        %350 = vmatpush.msra.mxu0 0.0
        %351 = vmatpush.msra.mxu0 0.0
        %352 = vmatpush.msra.mxu0 0.0
        %353 = vmatpush.msra.mxu0 0.0
        %354 = vmatpush.msra.mxu0 0.0
        %355 = vmatpush.msra.mxu0 0.0
        %356 = vmatpush.msra.mxu0 0.0
        %357 = vmatpush.msra.mxu0 0.0
        %358 = vmatpush.msra.mxu0 0.0
        %359 = vmatpush.msra.mxu0 0.0
        %360 = vmatpush.msra.mxu0 0.0
        %361 = vmatpush.msra.mxu0 0.0
        %362 = vmatpush.msra.mxu0 0.0
        %363 = vmatpush.msra.mxu0 0.0
        %v364 = vand.u32 %v303, 4294901760
        %v365 = vsub.f32 %v303, %v364
        %v366 = vand.u32 %v365, 4294901760
        %v367 = vsub.f32 %v365, %v366
        %v368 = vand.u32 %v367, 4294901760
        %369 = vmatpush.msra.mxu0 %v368
        %v370 = vand.u32 %v302, 4294901760
        %v371 = vsub.f32 %v302, %v370
        %v372 = vand.u32 %v371, 4294901760
        %v373 = vsub.f32 %v371, %v372
        %v374 = vand.u32 %v373, 4294901760
        %375 = vmatpush.msra.mxu0 %v374
        %v376 = vand.u32 %v310, 4294901760
        %377 = vmatmul.f32.gmra.mxu0 %v376
        %v378 = vpop.f32.mrf.mxu0
        %v379 = vadd.f32 %v340, %v378
        %v380 = vand.u32 %v313, 4294901760
        %381 = vmatmul.f32.gmra.mxu0 %v380
        %v382 = vpop.f32.mrf.mxu0
        %v383 = vadd.f32 %v348, %v382
        %384 = vdwg.mxu0
        %385 = vmatpush.msra.mxu0 0.0
        %386 = vmatpush.msra.mxu0 0.0
        %387 = vmatpush.msra.mxu0 0.0
        %388 = vmatpush.msra.mxu0 0.0
        %389 = vmatpush.msra.mxu0 0.0
        %390 = vmatpush.msra.mxu0 0.0
        %391 = vmatpush.msra.mxu0 0.0
        %392 = vmatpush.msra.mxu0 0.0
        %393 = vmatpush.msra.mxu0 0.0
        %394 = vmatpush.msra.mxu0 0.0
        %395 = vmatpush.msra.mxu0 0.0
        %396 = vmatpush.msra.mxu0 0.0
        %397 = vmatpush.msra.mxu0 0.0
        %398 = vmatpush.msra.mxu0 0.0
        %v399 = vand.u32 %v303, 4294901760
        %v400 = vsub.f32 %v303, %v399
        %401 = vmatpush.msra.mxu0 %v400
        %v402 = vand.u32 %v302, 4294901760
        %v403 = vsub.f32 %v302, %v402
        %404 = vmatpush.msra.mxu0 %v403
        %v405 = vand.u32 %v310, 4294901760
        %v406 = vsub.f32 %v310, %v405
        %407 = vmatmul.f32.gmra.mxu0 %v406
        %v408 = vpop.f32.mrf.mxu0
        %v409 = vadd.f32 %v379, %v408
        %v410 = vand.u32 %v313, 4294901760
        %v411 = vsub.f32 %v313, %v410
        %412 = vmatmul.f32.gmra.mxu0 %v411
        %v413 = vpop.f32.mrf.mxu0
        %v414 = vadd.f32 %v383, %v413
        %415 = vdwg.mxu0
        %416 = vmatpush.msra.mxu0 0.0
        %417 = vmatpush.msra.mxu0 0.0
        %418 = vmatpush.msra.mxu0 0.0
        %419 = vmatpush.msra.mxu0 0.0
        %420 = vmatpush.msra.mxu0 0.0
        %421 = vmatpush.msra.mxu0 0.0
        %422 = vmatpush.msra.mxu0 0.0
        %423 = vmatpush.msra.mxu0 0.0
        %424 = vmatpush.msra.mxu0 0.0
        %425 = vmatpush.msra.mxu0 0.0
        %426 = vmatpush.msra.mxu0 0.0
        %427 = vmatpush.msra.mxu0 0.0
        %428 = vmatpush.msra.mxu0 0.0
        %429 = vmatpush.msra.mxu0 0.0
        %v430 = vand.u32 %v303, 4294901760
        %431 = vmatpush.msra.mxu0 %v430
        %v432 = vand.u32 %v302, 4294901760
        %433 = vmatpush.msra.mxu0 %v432
        %v434 = vand.u32 %v310, 4294901760
        %v435 = vsub.f32 %v310, %v434
        %v436 = vand.u32 %v435, 4294901760
        %437 = vmatmul.f32.gmra.mxu0 %v436
        %v438 = vpop.f32.mrf.mxu0
        %v439 = vadd.f32 %v409, %v438
        %v440 = vand.u32 %v313, 4294901760
        %v441 = vsub.f32 %v313, %v440
        %v442 = vand.u32 %v441, 4294901760
        %443 = vmatmul.f32.gmra.mxu0 %v442
        %v444 = vpop.f32.mrf.mxu0
        %v445 = vadd.f32 %v414, %v444
        %446 = vdwg.mxu0
        %447 = vmatpush.msra.mxu0 0.0
        %448 = vmatpush.msra.mxu0 0.0
        %449 = vmatpush.msra.mxu0 0.0
        %450 = vmatpush.msra.mxu0 0.0
        %451 = vmatpush.msra.mxu0 0.0
        %452 = vmatpush.msra.mxu0 0.0
        %453 = vmatpush.msra.mxu0 0.0
        %454 = vmatpush.msra.mxu0 0.0
        %455 = vmatpush.msra.mxu0 0.0
        %456 = vmatpush.msra.mxu0 0.0
        %457 = vmatpush.msra.mxu0 0.0
        %458 = vmatpush.msra.mxu0 0.0
        %459 = vmatpush.msra.mxu0 0.0
        %460 = vmatpush.msra.mxu0 0.0
        %v461 = vand.u32 %v303, 4294901760
        %v462 = vsub.f32 %v303, %v461
        %v463 = vand.u32 %v462, 4294901760
        %464 = vmatpush.msra.mxu0 %v463
        %v465 = vand.u32 %v302, 4294901760
        %v466 = vsub.f32 %v302, %v465
        %v467 = vand.u32 %v466, 4294901760
        %468 = vmatpush.msra.mxu0 %v467
        %v469 = vand.u32 %v310, 4294901760
        %470 = vmatmul.f32.gmra.mxu0 %v469
        %v471 = vpop.f32.mrf.mxu0
        %v472 = vadd.f32 %v439, %v471
        %v473 = vand.u32 %v313, 4294901760
        %474 = vmatmul.f32.gmra.mxu0 %v473
        %v475 = vpop.f32.mrf.mxu0
        %v476 = vadd.f32 %v445, %v475
        %477 = vdwg.mxu0
        %478 = vmatpush.msra.mxu0 0.0
        %479 = vmatpush.msra.mxu0 0.0
        %480 = vmatpush.msra.mxu0 0.0
        %481 = vmatpush.msra.mxu0 0.0
        %482 = vmatpush.msra.mxu0 0.0
        %483 = vmatpush.msra.mxu0 0.0
        %484 = vmatpush.msra.mxu0 0.0
        %485 = vmatpush.msra.mxu0 0.0
        %486 = vmatpush.msra.mxu0 0.0
        %487 = vmatpush.msra.mxu0 0.0
        %488 = vmatpush.msra.mxu0 0.0
        %489 = vmatpush.msra.mxu0 0.0
        %490 = vmatpush.msra.mxu0 0.0
        %491 = vmatpush.msra.mxu0 0.0
        %v492 = vand.u32 %v303, 4294901760
        %493 = vmatpush.msra.mxu0 %v492
        %v494 = vand.u32 %v302, 4294901760
        %495 = vmatpush.msra.mxu0 %v494
        %v496 = vand.u32 %v310, 4294901760
        %497 = vmatmul.f32.gmra.mxu0 %v496
        %v498 = vpop.f32.mrf.mxu0
        %v499 = vadd.f32 %v472, %v498
        %v500 = vand.u32 %v313, 4294901760
        %501 = vmatmul.f32.gmra.mxu0 %v500
        %v502 = vpop.f32.mrf.mxu0
        %v503 = vadd.f32 %v476, %v502
        %504 = vdwg.mxu0
        %v505 = vtanh.pop %v499
        %v506 = vtanh.pop %v503
        %v507 = vld [vmem:[%s2] sm:$0xff]
        %v508 = vld [vmem:[%s2 + $0x8] sm:$0xff]
        %v509 = vld [vmem:[%s2 + $0x10] sm:$0xff]
        %v510 = vld [vmem:[%s2 + $0x18] sm:$0xff]
        %v511 = vld [vmem:[%s5] sm:$0x1]
        %v513 = vperm.slane %v511, 0
        %vm515 = vcmask 261120
        %v517 = vsel %vm515, %v505, 0
        %v520 = vsel %vm515, %v506, 0
        %522 = vmatpush.msra.mxu0 0.0
        %523 = vmatpush.msra.mxu0 0.0
        %524 = vmatpush.msra.mxu0 0.0
        %525 = vmatpush.msra.mxu0 0.0
        %526 = vmatpush.msra.mxu0 0.0
        %527 = vmatpush.msra.mxu0 0.0
        %528 = vmatpush.msra.mxu0 0.0
        %529 = vmatpush.msra.mxu0 0.0
        %530 = vmatpush.msra.mxu0 0.0
        %531 = vmatpush.msra.mxu0 0.0
        %532 = vmatpush.msra.mxu0 0.0
        %533 = vmatpush.msra.mxu0 0.0
        %v534 = vand.u32 %v510, 4294901760
        %535 = vmatpush.msra.mxu0 %v534
        %v536 = vand.u32 %v509, 4294901760
        %537 = vmatpush.msra.mxu0 %v536
        %v538 = vand.u32 %v508, 4294901760
        %539 = vmatpush.msra.mxu0 %v538
        %v540 = vand.u32 %v507, 4294901760
        %541 = vmatpush.msra.mxu0 %v540
        %v542 = vand.u32 %v517, 4294901760
        %v543 = vsub.f32 %v517, %v542
        %v544 = vand.u32 %v543, 4294901760
        %v545 = vsub.f32 %v543, %v544
        %v546 = vand.u32 %v545, 4294901760
        %547 = vmatmul.f32.gmra.mxu0 %v546
        %v548 = vpop.f32.mrf.mxu0
        %v549 = vadd.f32 %v513, %v548
        %v550 = vand.u32 %v520, 4294901760
        %v551 = vsub.f32 %v520, %v550
        %v552 = vand.u32 %v551, 4294901760
        %v553 = vsub.f32 %v551, %v552
        %v554 = vand.u32 %v553, 4294901760
        %555 = vmatmul.f32.gmra.mxu0 %v554
        %v556 = vpop.f32.mrf.mxu0
        %v557 = vadd.f32 %v513, %v556
        %558 = vdwg.mxu0
        %559 = vmatpush.msra.mxu0 0.0
        %560 = vmatpush.msra.mxu0 0.0
        %561 = vmatpush.msra.mxu0 0.0
        %562 = vmatpush.msra.mxu0 0.0
        %563 = vmatpush.msra.mxu0 0.0
        %564 = vmatpush.msra.mxu0 0.0
        %565 = vmatpush.msra.mxu0 0.0
        %566 = vmatpush.msra.mxu0 0.0
        %567 = vmatpush.msra.mxu0 0.0
        %568 = vmatpush.msra.mxu0 0.0
        %569 = vmatpush.msra.mxu0 0.0
        %570 = vmatpush.msra.mxu0 0.0
        %v571 = vand.u32 %v510, 4294901760
        %v572 = vsub.f32 %v510, %v571
        %v573 = vand.u32 %v572, 4294901760
        %v574 = vsub.f32 %v572, %v573
        %v575 = vand.u32 %v574, 4294901760
        %576 = vmatpush.msra.mxu0 %v575
        %v577 = vand.u32 %v509, 4294901760
        %v578 = vsub.f32 %v509, %v577
        %v579 = vand.u32 %v578, 4294901760
        %v580 = vsub.f32 %v578, %v579
        %v581 = vand.u32 %v580, 4294901760
        %582 = vmatpush.msra.mxu0 %v581
        %v583 = vand.u32 %v508, 4294901760
        %v584 = vsub.f32 %v508, %v583
        %v585 = vand.u32 %v584, 4294901760
        %v586 = vsub.f32 %v584, %v585
        %v587 = vand.u32 %v586, 4294901760
        %588 = vmatpush.msra.mxu0 %v587
        %v589 = vand.u32 %v507, 4294901760
        %v590 = vsub.f32 %v507, %v589
        %v591 = vand.u32 %v590, 4294901760
        %v592 = vsub.f32 %v590, %v591
        %v593 = vand.u32 %v592, 4294901760
        %594 = vmatpush.msra.mxu0 %v593
        %v595 = vand.u32 %v517, 4294901760
        %596 = vmatmul.f32.gmra.mxu0 %v595
        %v597 = vpop.f32.mrf.mxu0
        %v598 = vadd.f32 %v549, %v597
        %v599 = vand.u32 %v520, 4294901760
        %600 = vmatmul.f32.gmra.mxu0 %v599
        %v601 = vpop.f32.mrf.mxu0
        %v602 = vadd.f32 %v557, %v601
        %603 = vdwg.mxu0
        %604 = vmatpush.msra.mxu0 0.0
        %605 = vmatpush.msra.mxu0 0.0
        %606 = vmatpush.msra.mxu0 0.0
        %607 = vmatpush.msra.mxu0 0.0
        %608 = vmatpush.msra.mxu0 0.0
        %609 = vmatpush.msra.mxu0 0.0
        %610 = vmatpush.msra.mxu0 0.0
        %611 = vmatpush.msra.mxu0 0.0
        %612 = vmatpush.msra.mxu0 0.0
        %613 = vmatpush.msra.mxu0 0.0
        %614 = vmatpush.msra.mxu0 0.0
        %615 = vmatpush.msra.mxu0 0.0
        %v616 = vand.u32 %v510, 4294901760
        %v617 = vsub.f32 %v510, %v616
        %618 = vmatpush.msra.mxu0 %v617
        %v619 = vand.u32 %v509, 4294901760
        %v620 = vsub.f32 %v509, %v619
        %621 = vmatpush.msra.mxu0 %v620
        %v622 = vand.u32 %v508, 4294901760
        %v623 = vsub.f32 %v508, %v622
        %624 = vmatpush.msra.mxu0 %v623
        %v625 = vand.u32 %v507, 4294901760
        %v626 = vsub.f32 %v507, %v625
        %627 = vmatpush.msra.mxu0 %v626
        %v628 = vand.u32 %v517, 4294901760
        %v629 = vsub.f32 %v517, %v628
        %630 = vmatmul.f32.gmra.mxu0 %v629
        %v631 = vpop.f32.mrf.mxu0
        %v632 = vadd.f32 %v598, %v631
        %v633 = vand.u32 %v520, 4294901760
        %v634 = vsub.f32 %v520, %v633
        %635 = vmatmul.f32.gmra.mxu0 %v634
        %v636 = vpop.f32.mrf.mxu0
        %v637 = vadd.f32 %v602, %v636
        %638 = vdwg.mxu0
        %639 = vmatpush.msra.mxu0 0.0
        %640 = vmatpush.msra.mxu0 0.0
        %641 = vmatpush.msra.mxu0 0.0
        %642 = vmatpush.msra.mxu0 0.0
        %643 = vmatpush.msra.mxu0 0.0
        %644 = vmatpush.msra.mxu0 0.0
        %645 = vmatpush.msra.mxu0 0.0
        %646 = vmatpush.msra.mxu0 0.0
        %647 = vmatpush.msra.mxu0 0.0
        %648 = vmatpush.msra.mxu0 0.0
        %649 = vmatpush.msra.mxu0 0.0
        %650 = vmatpush.msra.mxu0 0.0
        %v651 = vand.u32 %v510, 4294901760
        %652 = vmatpush.msra.mxu0 %v651
        %v653 = vand.u32 %v509, 4294901760
        %654 = vmatpush.msra.mxu0 %v653
        %v655 = vand.u32 %v508, 4294901760
        %656 = vmatpush.msra.mxu0 %v655
        %v657 = vand.u32 %v507, 4294901760
        %658 = vmatpush.msra.mxu0 %v657
        %v659 = vand.u32 %v517, 4294901760
        %v660 = vsub.f32 %v517, %v659
        %v661 = vand.u32 %v660, 4294901760
        %662 = vmatmul.f32.gmra.mxu0 %v661
        %v663 = vpop.f32.mrf.mxu0
        %v664 = vadd.f32 %v632, %v663
        %v665 = vand.u32 %v520, 4294901760
        %v666 = vsub.f32 %v520, %v665
        %v667 = vand.u32 %v666, 4294901760
        %668 = vmatmul.f32.gmra.mxu0 %v667
        %v669 = vpop.f32.mrf.mxu0
        %v670 = vadd.f32 %v637, %v669
        %671 = vdwg.mxu0
        %672 = vmatpush.msra.mxu0 0.0
        %673 = vmatpush.msra.mxu0 0.0
        %674 = vmatpush.msra.mxu0 0.0
        %675 = vmatpush.msra.mxu0 0.0
        %676 = vmatpush.msra.mxu0 0.0
        %677 = vmatpush.msra.mxu0 0.0
        %678 = vmatpush.msra.mxu0 0.0
        %679 = vmatpush.msra.mxu0 0.0
        %680 = vmatpush.msra.mxu0 0.0
        %681 = vmatpush.msra.mxu0 0.0
        %682 = vmatpush.msra.mxu0 0.0
        %683 = vmatpush.msra.mxu0 0.0
        %v684 = vand.u32 %v510, 4294901760
        %v685 = vsub.f32 %v510, %v684
        %v686 = vand.u32 %v685, 4294901760
        %687 = vmatpush.msra.mxu0 %v686
        %v688 = vand.u32 %v509, 4294901760
        %v689 = vsub.f32 %v509, %v688
        %v690 = vand.u32 %v689, 4294901760
        %691 = vmatpush.msra.mxu0 %v690
        %v692 = vand.u32 %v508, 4294901760
        %v693 = vsub.f32 %v508, %v692
        %v694 = vand.u32 %v693, 4294901760
        %695 = vmatpush.msra.mxu0 %v694
        %v696 = vand.u32 %v507, 4294901760
        %v697 = vsub.f32 %v507, %v696
        %v698 = vand.u32 %v697, 4294901760
        %699 = vmatpush.msra.mxu0 %v698
        %v700 = vand.u32 %v517, 4294901760
        %701 = vmatmul.f32.gmra.mxu0 %v700
        %v702 = vpop.f32.mrf.mxu0
        %v703 = vadd.f32 %v664, %v702
        %v704 = vand.u32 %v520, 4294901760
        %705 = vmatmul.f32.gmra.mxu0 %v704
        %v706 = vpop.f32.mrf.mxu0
        %v707 = vadd.f32 %v670, %v706
        %708 = vdwg.mxu0
        %709 = vmatpush.msra.mxu0 0.0
        %710 = vmatpush.msra.mxu0 0.0
        %711 = vmatpush.msra.mxu0 0.0
        %712 = vmatpush.msra.mxu0 0.0
        %713 = vmatpush.msra.mxu0 0.0
        %714 = vmatpush.msra.mxu0 0.0
        %715 = vmatpush.msra.mxu0 0.0
        %716 = vmatpush.msra.mxu0 0.0
        %717 = vmatpush.msra.mxu0 0.0
        %718 = vmatpush.msra.mxu0 0.0
        %719 = vmatpush.msra.mxu0 0.0
        %720 = vmatpush.msra.mxu0 0.0
        %v721 = vand.u32 %v510, 4294901760
        %722 = vmatpush.msra.mxu0 %v721
        %v723 = vand.u32 %v509, 4294901760
        %724 = vmatpush.msra.mxu0 %v723
        %v725 = vand.u32 %v508, 4294901760
        %726 = vmatpush.msra.mxu0 %v725
        %v727 = vand.u32 %v507, 4294901760
        %728 = vmatpush.msra.mxu0 %v727
        %v729 = vand.u32 %v517, 4294901760
        %730 = vmatmul.f32.gmra.mxu0 %v729
        %v731 = vpop.f32.mrf.mxu0
        %v732 = vadd.f32 %v703, %v731
        %v733 = vand.u32 %v520, 4294901760
        %734 = vmatmul.f32.gmra.mxu0 %v733
        %v735 = vpop.f32.mrf.mxu0
        %v736 = vadd.f32 %v707, %v735
        %737 = vdwg.mxu0
        %v738 = vtanh.pop %v732
        %v739 = vtanh.pop %v736
        %v740 = vld [vmem:[%s3] sm:$0xff]
        %v741 = vld [vmem:[%s3 + $0x8] sm:$0xff]
        %v742 = vld [vmem:[%s3 + $0x10] sm:$0xff]
        %v743 = vld [vmem:[%s3 + $0x18] sm:$0xff]
        %v744 = vld [vmem:[%s6] sm:$0x1]
        %v746 = vperm.slane %v744, 0
        %v749 = vsel %vm515, %v738, 0
        %v752 = vsel %vm515, %v739, 0
        %754 = vmatpush.msra.mxu0 0.0
        %755 = vmatpush.msra.mxu0 0.0
        %756 = vmatpush.msra.mxu0 0.0
        %757 = vmatpush.msra.mxu0 0.0
        %758 = vmatpush.msra.mxu0 0.0
        %759 = vmatpush.msra.mxu0 0.0
        %760 = vmatpush.msra.mxu0 0.0
        %761 = vmatpush.msra.mxu0 0.0
        %762 = vmatpush.msra.mxu0 0.0
        %763 = vmatpush.msra.mxu0 0.0
        %764 = vmatpush.msra.mxu0 0.0
        %765 = vmatpush.msra.mxu0 0.0
        %v766 = vand.u32 %v743, 4294901760
        %767 = vmatpush.msra.mxu0 %v766
        %v768 = vand.u32 %v742, 4294901760
        %769 = vmatpush.msra.mxu0 %v768
        %v770 = vand.u32 %v741, 4294901760
        %771 = vmatpush.msra.mxu0 %v770
        %v772 = vand.u32 %v740, 4294901760
        %773 = vmatpush.msra.mxu0 %v772
        %v774 = vand.u32 %v749, 4294901760
        %v775 = vsub.f32 %v749, %v774
        %v776 = vand.u32 %v775, 4294901760
        %v777 = vsub.f32 %v775, %v776
        %v778 = vand.u32 %v777, 4294901760
        %779 = vmatmul.f32.gmra.mxu0 %v778
        %v780 = vpop.f32.mrf.mxu0
        %v781 = vadd.f32 %v746, %v780
        %v782 = vand.u32 %v752, 4294901760
        %v783 = vsub.f32 %v752, %v782
        %v784 = vand.u32 %v783, 4294901760
        %v785 = vsub.f32 %v783, %v784
        %v786 = vand.u32 %v785, 4294901760
        %787 = vmatmul.f32.gmra.mxu0 %v786
        %v788 = vpop.f32.mrf.mxu0
        %v789 = vadd.f32 %v746, %v788
        %790 = vdwg.mxu0
        %791 = vmatpush.msra.mxu0 0.0
        %792 = vmatpush.msra.mxu0 0.0
        %793 = vmatpush.msra.mxu0 0.0
        %794 = vmatpush.msra.mxu0 0.0
        %795 = vmatpush.msra.mxu0 0.0
        %796 = vmatpush.msra.mxu0 0.0
        %797 = vmatpush.msra.mxu0 0.0
        %798 = vmatpush.msra.mxu0 0.0
        %799 = vmatpush.msra.mxu0 0.0
        %800 = vmatpush.msra.mxu0 0.0
        %801 = vmatpush.msra.mxu0 0.0
        %802 = vmatpush.msra.mxu0 0.0
        %v803 = vand.u32 %v743, 4294901760
        %v804 = vsub.f32 %v743, %v803
        %v805 = vand.u32 %v804, 4294901760
        %v806 = vsub.f32 %v804, %v805
        %v807 = vand.u32 %v806, 4294901760
        %808 = vmatpush.msra.mxu0 %v807
        %v809 = vand.u32 %v742, 4294901760
        %v810 = vsub.f32 %v742, %v809
        %v811 = vand.u32 %v810, 4294901760
        %v812 = vsub.f32 %v810, %v811
        %v813 = vand.u32 %v812, 4294901760
        %814 = vmatpush.msra.mxu0 %v813
        %v815 = vand.u32 %v741, 4294901760
        %v816 = vsub.f32 %v741, %v815
        %v817 = vand.u32 %v816, 4294901760
        %v818 = vsub.f32 %v816, %v817
        %v819 = vand.u32 %v818, 4294901760
        %820 = vmatpush.msra.mxu0 %v819
        %v821 = vand.u32 %v740, 4294901760
        %v822 = vsub.f32 %v740, %v821
        %v823 = vand.u32 %v822, 4294901760
        %v824 = vsub.f32 %v822, %v823
        %v825 = vand.u32 %v824, 4294901760
        %826 = vmatpush.msra.mxu0 %v825
        %v827 = vand.u32 %v749, 4294901760
        %828 = vmatmul.f32.gmra.mxu0 %v827
        %v829 = vpop.f32.mrf.mxu0
        %v830 = vadd.f32 %v781, %v829
        %v831 = vand.u32 %v752, 4294901760
        %832 = vmatmul.f32.gmra.mxu0 %v831
        %v833 = vpop.f32.mrf.mxu0
        %v834 = vadd.f32 %v789, %v833
        %835 = vdwg.mxu0
        %836 = vmatpush.msra.mxu0 0.0
        %837 = vmatpush.msra.mxu0 0.0
        %838 = vmatpush.msra.mxu0 0.0
        %839 = vmatpush.msra.mxu0 0.0
        %840 = vmatpush.msra.mxu0 0.0
        %841 = vmatpush.msra.mxu0 0.0
        %842 = vmatpush.msra.mxu0 0.0
        %843 = vmatpush.msra.mxu0 0.0
        %844 = vmatpush.msra.mxu0 0.0
        %845 = vmatpush.msra.mxu0 0.0
        %846 = vmatpush.msra.mxu0 0.0
        %847 = vmatpush.msra.mxu0 0.0
        %v848 = vand.u32 %v743, 4294901760
        %v849 = vsub.f32 %v743, %v848
        %850 = vmatpush.msra.mxu0 %v849
        %v851 = vand.u32 %v742, 4294901760
        %v852 = vsub.f32 %v742, %v851
        %853 = vmatpush.msra.mxu0 %v852
        %v854 = vand.u32 %v741, 4294901760
        %v855 = vsub.f32 %v741, %v854
        %856 = vmatpush.msra.mxu0 %v855
        %v857 = vand.u32 %v740, 4294901760
        %v858 = vsub.f32 %v740, %v857
        %859 = vmatpush.msra.mxu0 %v858
        %v860 = vand.u32 %v749, 4294901760
        %v861 = vsub.f32 %v749, %v860
        %862 = vmatmul.f32.gmra.mxu0 %v861
        %v863 = vpop.f32.mrf.mxu0
        %v864 = vadd.f32 %v830, %v863
        %v865 = vand.u32 %v752, 4294901760
        %v866 = vsub.f32 %v752, %v865
        %867 = vmatmul.f32.gmra.mxu0 %v866
        %v868 = vpop.f32.mrf.mxu0
        %v869 = vadd.f32 %v834, %v868
        %870 = vdwg.mxu0
        %871 = vmatpush.msra.mxu0 0.0
        %872 = vmatpush.msra.mxu0 0.0
        %873 = vmatpush.msra.mxu0 0.0
        %874 = vmatpush.msra.mxu0 0.0
        %875 = vmatpush.msra.mxu0 0.0
        %876 = vmatpush.msra.mxu0 0.0
        %877 = vmatpush.msra.mxu0 0.0
        %878 = vmatpush.msra.mxu0 0.0
        %879 = vmatpush.msra.mxu0 0.0
        %880 = vmatpush.msra.mxu0 0.0
        %881 = vmatpush.msra.mxu0 0.0
        %882 = vmatpush.msra.mxu0 0.0
        %v883 = vand.u32 %v743, 4294901760
        %884 = vmatpush.msra.mxu0 %v883
        %v885 = vand.u32 %v742, 4294901760
        %886 = vmatpush.msra.mxu0 %v885
        %v887 = vand.u32 %v741, 4294901760
        %888 = vmatpush.msra.mxu0 %v887
        %v889 = vand.u32 %v740, 4294901760
        %890 = vmatpush.msra.mxu0 %v889
        %v891 = vand.u32 %v749, 4294901760
        %v892 = vsub.f32 %v749, %v891
        %v893 = vand.u32 %v892, 4294901760
        %894 = vmatmul.f32.gmra.mxu0 %v893
        %v895 = vpop.f32.mrf.mxu0
        %v896 = vadd.f32 %v864, %v895
        %v897 = vand.u32 %v752, 4294901760
        %v898 = vsub.f32 %v752, %v897
        %v899 = vand.u32 %v898, 4294901760
        %900 = vmatmul.f32.gmra.mxu0 %v899
        %v901 = vpop.f32.mrf.mxu0
        %v902 = vadd.f32 %v869, %v901
        %903 = vdwg.mxu0
        %904 = vmatpush.msra.mxu0 0.0
        %905 = vmatpush.msra.mxu0 0.0
        %906 = vmatpush.msra.mxu0 0.0
        %907 = vmatpush.msra.mxu0 0.0
        %908 = vmatpush.msra.mxu0 0.0
        %909 = vmatpush.msra.mxu0 0.0
        %910 = vmatpush.msra.mxu0 0.0
        %911 = vmatpush.msra.mxu0 0.0
        %912 = vmatpush.msra.mxu0 0.0
        %913 = vmatpush.msra.mxu0 0.0
        %914 = vmatpush.msra.mxu0 0.0
        %915 = vmatpush.msra.mxu0 0.0
        %v916 = vand.u32 %v743, 4294901760
        %v917 = vsub.f32 %v743, %v916
        %v918 = vand.u32 %v917, 4294901760
        %919 = vmatpush.msra.mxu0 %v918
        %v920 = vand.u32 %v742, 4294901760
        %v921 = vsub.f32 %v742, %v920
        %v922 = vand.u32 %v921, 4294901760
        %923 = vmatpush.msra.mxu0 %v922
        %v924 = vand.u32 %v741, 4294901760
        %v925 = vsub.f32 %v741, %v924
        %v926 = vand.u32 %v925, 4294901760
        %927 = vmatpush.msra.mxu0 %v926
        %v928 = vand.u32 %v740, 4294901760
        %v929 = vsub.f32 %v740, %v928
        %v930 = vand.u32 %v929, 4294901760
        %931 = vmatpush.msra.mxu0 %v930
        %v932 = vand.u32 %v749, 4294901760
        %933 = vmatmul.f32.gmra.mxu0 %v932
        %v934 = vpop.f32.mrf.mxu0
        %v935 = vadd.f32 %v896, %v934
        %v936 = vand.u32 %v752, 4294901760
        %937 = vmatmul.f32.gmra.mxu0 %v936
        %v938 = vpop.f32.mrf.mxu0
        %v939 = vadd.f32 %v902, %v938
        %940 = vdwg.mxu0
        %941 = vmatpush.msra.mxu0 0.0
        %942 = vmatpush.msra.mxu0 0.0
        %943 = vmatpush.msra.mxu0 0.0
        %944 = vmatpush.msra.mxu0 0.0
        %945 = vmatpush.msra.mxu0 0.0
        %946 = vmatpush.msra.mxu0 0.0
        %947 = vmatpush.msra.mxu0 0.0
        %948 = vmatpush.msra.mxu0 0.0
        %949 = vmatpush.msra.mxu0 0.0
        %950 = vmatpush.msra.mxu0 0.0
        %951 = vmatpush.msra.mxu0 0.0
        %952 = vmatpush.msra.mxu0 0.0
        %v953 = vand.u32 %v743, 4294901760
        %954 = vmatpush.msra.mxu0 %v953
        %v955 = vand.u32 %v742, 4294901760
        %956 = vmatpush.msra.mxu0 %v955
        %v957 = vand.u32 %v741, 4294901760
        %958 = vmatpush.msra.mxu0 %v957
        %v959 = vand.u32 %v740, 4294901760
        %960 = vmatpush.msra.mxu0 %v959
        %v961 = vand.u32 %v749, 4294901760
        %962 = vmatmul.f32.gmra.mxu0 %v961
        %v963 = vpop.f32.mrf.mxu0
        %v964 = vadd.f32 %v935, %v963
        %v965 = vand.u32 %v752, 4294901760
        %966 = vmatmul.f32.gmra.mxu0 %v965
        %v967 = vpop.f32.mrf.mxu0
        %v968 = vadd.f32 %v939, %v967
        %969 = vdwg.mxu0
        %v970 = vmul.f32 %v964, 0.5
        %v971 = vmul.f32 %v968, 0.5
        %vm972 = vcmask 64512
        %973 = vst.msk [vmem:[%s280] sm:$0xff] %vm972, %v970
        %974 = vst.msk [vmem:[%s280 + $0x8] sm:$0xff] %vm972, %v971
        %s975 = sand.u32 %s178, 1
        %s976 = sand.u32 %s178, 1
        %s977 = smul.addr %s976, 16
        %s978 = scalar_lea.vmem [#allocation2], %s977
        // Predicated region
        $region49: #{tpu_custom_call.1} parent=47 // pred_check
          %p979 = pneg %p188
        $region50: #{tpu_custom_call.1} parent=47 // pred_check_branch
          %981 = sbr.rel (%p979) target = $region52
        $region51: #{tpu_custom_call.1} parent=47 // pred_region
          %s982 = smul.u32 2, %s18
          %s983 = ssub.s32 3, %s982
          %p984 = scmp.lt.s32.totalorder %s983, 2
          %s985 = scalar_select %p984, %s983, 2
          %s986 = smul.u32 8, %s985
          %p987 = scmp.ne.s32.totalorder 0, %s986
          %s988 = smul.addr %s982, 8
          %s989 = scalar_lea.vmem %s7, %s988
          // Predicated region
          $region53: #{tpu_custom_call.1} parent=51 // pred_check
            %p990 = pneg %p987
          $region54: #{tpu_custom_call.1} parent=51 // pred_check_branch
            %992 = sbr.rel (%p990) target = $region56
          $region55: #{tpu_custom_call.1} parent=51 // pred_region
            // Predicated region
            $region57: #{tpu_custom_call.1} parent=55 // pred_check
              _
            $region58: #{tpu_custom_call.1} parent=55 // pred_check_branch
              %994 = sbr.rel (0) target = $region60
            $region59: #{tpu_custom_call.1} parent=55 // pred_region
              // Predicated region
              $region79: #{tpu_custom_call.1} parent=59 // pred_check
                _
              $region80: #{tpu_custom_call.1} parent=59 // pred_check_branch
                %1046 = sbr.rel (0) target = $region82
              $region81: #{tpu_custom_call.1} parent=59 // pred_region
                %s1047 = sshrl.u32 %s985, 1
                // While loop
                $region83: #{tpu_custom_call.1} parent=81 // loop_pre_header
                  _
                $region84: #{tpu_custom_call.1} parent=81 // loop_header
                  %s1049 = sphi 0, %s1051
                  %p1050 = scmp.ge.s32.totalorder %s1049, %s1047
                  %s1054 = sphi 0, %s1063
                  %s1055 = sphi %s978, %s1066
                  %s1056 = sphi %s989, %s1067
                $region85: #{tpu_custom_call.1} parent=81 // loop_header_branch
                  %1053 = sbr.rel (%p1050) target = $region89
                $region86: #{tpu_custom_call.1} parent=81 // loop_body
                  %v1057 = vld [vmem:[%s1055] sm:$0xff]
                  %1058 = vst [vmem:[%s1056] sm:$0xff] %v1057
                  %v1059 = vld [vmem:[%s1055 + $0x8] sm:$0xff]
                  %1060 = vst [vmem:[%s1056 + $0x8] sm:$0xff] %v1059
                  %s1061 = sadd.s32 1, %s1054
                  %p1062 = scmp.ge.s32.totalorder %s1061, %s1047
                  %s1063 = scalar_select %p1062, 0, %s1061
                  %s1064 = smul.u32 %s1063, 16
                  %s1065 = smul.u32 %s1063, 16
                  %s1066 = scalar_lea.vmem %s978, %s1064 [#allocation2]
                  %s1067 = scalar_lea.vmem %s989, %s1065
                $region87: #{tpu_custom_call.1} parent=81 // loop_footer
                  %s1051 = sadd.s32 %s1049, 1
                $region88: #{tpu_custom_call.1} parent=81 // loop_footer_branch
                  %1048 = sbr.rel target = $region84
                $region89: #{tpu_custom_call.1} parent=81 // loop_exit
                  _
                %s1068 = sshrl.u32 %s985, 1
                %s1069 = sand.u32 %s985, 1
                %s1070 = smul.u32 %s1068, 2
                %s1071 = smul.u32 8, %s1070
                %s1072 = scalar_lea.vmem %s978, %s1071 [#allocation2]
                %s1073 = smul.u32 8, %s1070
                %s1074 = scalar_lea.vmem %s989, %s1073
                // While loop
                $region90: #{tpu_custom_call.1} parent=81 // loop_pre_header
                  _
                $region91: #{tpu_custom_call.1} parent=81 // loop_header
                  %s1076 = sphi 0, %s1078
                  %p1077 = scmp.ge.s32.totalorder %s1076, %s1069
                  %s1081 = sphi 0, %s1088
                  %s1082 = sphi %s1072, %s1091
                  %s1083 = sphi %s1074, %s1092
                $region92: #{tpu_custom_call.1} parent=81 // loop_header_branch
                  %1080 = sbr.rel (%p1077) target = $region96
                $region93: #{tpu_custom_call.1} parent=81 // loop_body
                  %v1084 = vld [vmem:[%s1082] sm:$0xff]
                  %1085 = vst [vmem:[%s1083] sm:$0xff] %v1084
                  %s1086 = sadd.s32 1, %s1081
                  %p1087 = scmp.ge.s32.totalorder %s1086, %s1069
                  %s1088 = scalar_select %p1087, 0, %s1086
                  %s1089 = smul.u32 %s1088, 8
                  %s1090 = smul.u32 %s1088, 8
                  %s1091 = scalar_lea.vmem %s1072, %s1089 [#allocation2]
                  %s1092 = scalar_lea.vmem %s1074, %s1090
                $region94: #{tpu_custom_call.1} parent=81 // loop_footer
                  %s1078 = sadd.s32 %s1076, 1
                $region95: #{tpu_custom_call.1} parent=81 // loop_footer_branch
                  %1075 = sbr.rel target = $region91
                $region96: #{tpu_custom_call.1} parent=81 // loop_exit
                  _
              $region82: #{tpu_custom_call.1} parent=59 // pred_fallthru
                _
              // Predicated region
              $region97: #{tpu_custom_call.1} parent=59 // pred_check
                _
              $region98: #{tpu_custom_call.1} parent=59 // pred_check_branch
                %1094 = sbr.rel target = $region100
              $region99: #{tpu_custom_call.1} parent=59 // pred_region
                _
              $region100: #{tpu_custom_call.1} parent=59 // pred_fallthru
                _
            $region60: #{tpu_custom_call.1} parent=55 // pred_fallthru
              _
            // Predicated region
            $region61: #{tpu_custom_call.1} parent=55 // pred_check
              _
            $region62: #{tpu_custom_call.1} parent=55 // pred_check_branch
              %996 = sbr.rel target = $region64
            $region63: #{tpu_custom_call.1} parent=55 // pred_region
              %s998 = ssub.s32 256, 1
              %s999 = sshrl.u32 %s985, 1
              // While loop
              $region65: #{tpu_custom_call.1} parent=63 // loop_pre_header
                _
              $region66: #{tpu_custom_call.1} parent=63 // loop_header
                %s1001 = sphi 0, %s1003
                %p1002 = scmp.ge.s32.totalorder %s1001, %s999
                %s1006 = sphi 0, %s1015
                %s1007 = sphi %s978, %s1018
                %s1008 = sphi %s989, %s1019
              $region67: #{tpu_custom_call.1} parent=63 // loop_header_branch
                %1005 = sbr.rel (%p1002) target = $region71
              $region68: #{tpu_custom_call.1} parent=63 // loop_body
                %v1009 = vld [vmem:[%s1007] sm:%s998]
                %1010 = vst [vmem:[%s1008] sm:%s998] %v1009
                %v1011 = vld [vmem:[%s1007 + $0x8] sm:%s998]
                %1012 = vst [vmem:[%s1008 + $0x8] sm:%s998] %v1011
                %s1013 = sadd.s32 1, %s1006
                %p1014 = scmp.ge.s32.totalorder %s1013, %s999
                %s1015 = scalar_select %p1014, 0, %s1013
                %s1016 = smul.u32 %s1015, 16
                %s1017 = smul.u32 %s1015, 16
                %s1018 = scalar_lea.vmem %s978, %s1016 [#allocation2]
                %s1019 = scalar_lea.vmem %s989, %s1017
              $region69: #{tpu_custom_call.1} parent=63 // loop_footer
                %s1003 = sadd.s32 %s1001, 1
              $region70: #{tpu_custom_call.1} parent=63 // loop_footer_branch
                %1000 = sbr.rel target = $region66
              $region71: #{tpu_custom_call.1} parent=63 // loop_exit
                _
              %s1020 = sshrl.u32 %s985, 1
              %s1021 = sand.u32 %s985, 1
              %s1022 = smul.u32 %s1020, 2
              %s1023 = smul.u32 8, %s1022
              %s1024 = scalar_lea.vmem %s978, %s1023 [#allocation2]
              %s1025 = smul.u32 8, %s1022
              %s1026 = scalar_lea.vmem %s989, %s1025
              // While loop
              $region72: #{tpu_custom_call.1} parent=63 // loop_pre_header
                _
              $region73: #{tpu_custom_call.1} parent=63 // loop_header
                %s1028 = sphi 0, %s1030
                %p1029 = scmp.ge.s32.totalorder %s1028, %s1021
                %s1033 = sphi 0, %s1040
                %s1034 = sphi %s1024, %s1043
                %s1035 = sphi %s1026, %s1044
              $region74: #{tpu_custom_call.1} parent=63 // loop_header_branch
                %1032 = sbr.rel (%p1029) target = $region78
              $region75: #{tpu_custom_call.1} parent=63 // loop_body
                %v1036 = vld [vmem:[%s1034] sm:%s998]
                %1037 = vst [vmem:[%s1035] sm:%s998] %v1036
                %s1038 = sadd.s32 1, %s1033
                %p1039 = scmp.ge.s32.totalorder %s1038, %s1021
                %s1040 = scalar_select %p1039, 0, %s1038
                %s1041 = smul.u32 %s1040, 8
                %s1042 = smul.u32 %s1040, 8
                %s1043 = scalar_lea.vmem %s1024, %s1041 [#allocation2]
                %s1044 = scalar_lea.vmem %s1026, %s1042
              $region76: #{tpu_custom_call.1} parent=63 // loop_footer
                %s1030 = sadd.s32 %s1028, 1
              $region77: #{tpu_custom_call.1} parent=63 // loop_footer_branch
                %1027 = sbr.rel target = $region73
              $region78: #{tpu_custom_call.1} parent=63 // loop_exit
                _
            $region64: #{tpu_custom_call.1} parent=55 // pred_fallthru
              _
          $region56: #{tpu_custom_call.1} parent=51 // pred_fallthru
            _
          %1095 = vnop
        $region52: #{tpu_custom_call.1} parent=47 // pred_fallthru
          _
      $region48: #{tpu_custom_call.1} parent=5 // pred_fallthru
        _
      %p1096 = scmp.le.s32.totalorder 2, %s13
      // Predicated region
      $region101: #{tpu_custom_call.1} parent=5 // pred_check
        %p1097 = pneg %p1096
      $region102: #{tpu_custom_call.1} parent=5 // pred_check_branch
        %1099 = sbr.rel (%p1097) target = $region104
      $region103: #{tpu_custom_call.1} parent=5 // pred_region
        %s1100 = ssub.s32 %s13, 2
        // Predicated region
        $region105: #{tpu_custom_call.1} parent=103 // pred_check
          %p1101 = pneg %p194
        $region106: #{tpu_custom_call.1} parent=103 // pred_check_branch
          %1103 = sbr.rel (%p1101) target = $region108
        $region107: #{tpu_custom_call.1} parent=103 // pred_region
          %s1104 = sand.u32 %s179, 1
          %s1105 = sand.u32 %s179, 1
          %s1106 = smul.addr %s1105, 16
          %s1107 = scalar_lea.vmem [#allocation2], %s1106
        $region108: #{tpu_custom_call.1} parent=103 // pred_fallthru
          _
      $region104: #{tpu_custom_call.1} parent=5 // pred_fallthru
        _
    $region6: #{tpu_custom_call.1} parent=1 // loop_footer
      %s17 = sadd.s32 1, %s13
    $region7: #{tpu_custom_call.1} parent=1 // loop_footer_branch
      %12 = sbr.rel target = $region3
    $region8: #{tpu_custom_call.1} parent=1 // loop_exit
      _

</llo_original>
